<compile_context>
chip_gen: v6e
topology: v6e:2x2x1
jax: 0.10.0
libtpu: 0.0.40
codegen_flags: <defaults>
</compile_context>

<pallas_src>
import functools
import math

import jax
import jax.numpy as jnp
from jax.experimental import pallas as pl
from jax.experimental.pallas import tpu as pltpu


def _round_up(x, m):
    return (x + m - 1) // m * m


def _decoder_kernel(x_ref, w1_ref, b1_ref, w2_ref, b2_ref, w3_ref, o_ref):
    # fc1: bf16 operands on the MXU (x cast in-kernel), f32 accumulation.
    x = x_ref[...].astype(jnp.bfloat16)
    h1 = jnp.dot(x, w1_ref[...], preferred_element_type=jnp.float32)
    h1 = jnp.maximum(h1 + b1_ref[...], 0.0)
    # fc2 + bias + ReLU.
    h2 = jnp.dot(h1.astype(jnp.bfloat16), w2_ref[...],
                 preferred_element_type=jnp.float32)
    h2 = jnp.maximum(h2 + b2_ref[...], 0.0)
    # fc3 (no bias). Output block is exactly (bn, out_channels) in the caller's
    # dtype -- only real output bytes hit HBM.
    out = jnp.dot(h2.astype(jnp.bfloat16), w3_ref[...],
                  preferred_element_type=jnp.float32)
    o_ref[...] = out.astype(o_ref.dtype)


def prepare_params(w1, b1, w2, b2, w3):
    """One-time weight prep (run once, outside the per-call path).

    w1/w2/w3 are already pre-transposed to [in_features, out_features]
    (PyTorch stores [out, in]); biases become [1, out] f32 rows.
    """
    return (
        w1.astype(jnp.bfloat16), b1.reshape(1, -1).astype(jnp.float32),
        w2.astype(jnp.bfloat16), b2.reshape(1, -1).astype(jnp.float32),
        w3.astype(jnp.bfloat16),
    )


@functools.partial(jax.jit, static_argnames=("block_n",))
def spe_spa_atten_decoder(x, w1_bf, b1_f, w2_bf, b2_f, w3_bf, *, block_n=2048):
    """Fused 3-layer MLP forward: relu(relu(x@W1+b1)@W2+b2)@W3.

    x: [..., in_channels]; weights from prepare_params(). Returns
    [..., out_channels] in x.dtype.
    """
    lead = x.shape[:-1]
    cin = x.shape[-1]
    n = math.prod(lead) if lead else 1
    x2 = x.reshape(n, cin)

    hid = w1_bf.shape[1]
    mid = w2_bf.shape[1]
    cout = w3_bf.shape[1]

    # Batch-tile selection:
    #  * small n: one grid step covering the whole batch (rounded to sublane 8)
    #  * large n: multiple of 128 (clean bf16 (16,128) tiles, full MXU passes),
    #    capped at block_n and at ~n/2 so the parallel grid has >=2 steps and
    #    both v7x TensorCores get work.
    if n <= 128:
        bn = _round_up(max(n, 8), 8)
    else:
        bn = min(block_n, _round_up(n, 128))
        bn = min(bn, _round_up(pl.cdiv(n, 2), 128))
    grid = (pl.cdiv(n, bn),)

    # No batch padding: Pallas masks OOB output rows of the last partial block,
    # and all compute is row-local, so garbage OOB input rows never propagate.
    out = pl.pallas_call(
        _decoder_kernel,
        out_shape=jax.ShapeDtypeStruct((n, cout), x.dtype),
        grid_spec=pltpu.PrefetchScalarGridSpec(
            num_scalar_prefetch=0,
            grid=grid,
            in_specs=[
                pl.BlockSpec((bn, cin), lambda i: (i, 0)),    # x tile (f32)
                pl.BlockSpec((cin, hid), lambda i: (0, 0)),   # W1 (resident)
                pl.BlockSpec((1, hid), lambda i: (0, 0)),     # b1
                pl.BlockSpec((hid, mid), lambda i: (0, 0)),   # W2
                pl.BlockSpec((1, mid), lambda i: (0, 0)),     # b2
                pl.BlockSpec((mid, cout), lambda i: (0, 0)),  # W3
            ],
            out_specs=pl.BlockSpec((bn, cout), lambda i: (i, 0)),
        ),
        compiler_params=pltpu.CompilerParams(
            dimension_semantics=("parallel",),
            # NOTE: only needed if block_n is pushed to >=8192 on v5e:
            # vmem_limit_bytes=32 << 20,
        ),
    )(x2, w1_bf, b1_f, w2_bf, b2_f, w3_bf)

    return out.reshape(*lead, cout)


def _init_linear(key, fan_in, fan_out, bias=True):
    """Deterministic PyTorch-style init; W returned pre-transposed [in, out]."""
    kw, kb = jax.random.split(key)
    bound = 1.0 / jnp.sqrt(fan_in)
    w = jax.random.uniform(kw, (fan_in, fan_out), jnp.float32, -bound, bound)
    if bias:
        b = jax.random.uniform(kb, (1, fan_out), jnp.float32, -bound, bound)
        return w, b
    return w, None


if __name__ == "__main__":
    # Small, module-consistent shapes: batch=2, seq=8 rows of in_channels=32.
    B, S = 2, 8
    IN_CHANNELS = 32
    MID_CHANNELS = 128
    OUT_CHANNELS = 16
    HIDDEN = 128      # fc1 output is hard-coded to 128 in the module

    root = jax.random.PRNGKey(0)
    kx, k1, k2, k3 = jax.random.split(root, 4)

    x = jax.random.normal(kx, (B, S, IN_CHANNELS), jnp.float32)
    w1, b1 = _init_linear(k1, IN_CHANNELS, HIDDEN, bias=True)         # fc1
    w2, b2 = _init_linear(k2, HIDDEN, MID_CHANNELS, bias=True)        # fc2
    w3, _ = _init_linear(k3, MID_CHANNELS, OUT_CHANNELS, bias=False)  # fc3

    # One-time weight prep (bf16 MXU operands, f32 biases).
    params = prepare_params(w1, b1, w2, b2, w3)

    out = spe_spa_atten_decoder(x, *params)
    out = jax.block_until_ready(out)

    # Pure-JAX reference with the same bf16-operand / f32-accumulate semantics.
    # (bf16 MXU operands differ from a pure-f32 PyTorch forward at ~1e-2 level.)
    xb = x.reshape(-1, IN_CHANNELS).astype(jnp.bfloat16)
    h = jnp.maximum(jnp.dot(xb, w1.astype(jnp.bfloat16),
                            preferred_element_type=jnp.float32) + b1, 0.0)
    h = jnp.maximum(jnp.dot(h.astype(jnp.bfloat16), w2.astype(jnp.bfloat16),
                            preferred_element_type=jnp.float32) + b2, 0.0)
    ref = jnp.dot(h.astype(jnp.bfloat16), w3.astype(jnp.bfloat16),
                  preferred_element_type=jnp.float32)
    ref = ref.reshape(B, S, OUT_CHANNELS).astype(out.dtype)

    assert out.shape == (B, S, OUT_CHANNELS)
    assert jnp.allclose(out, ref, atol=2e-2, rtol=2e-2)

    print("KERNEL_OK")
</pallas_src>

<mosaic_0001>
module attributes {stable_mosaic.version = 11 : i64} {
  func.func @_decoder_kernel(%arg0: i32, %arg1: memref<16x32xf32, #tpu.memory_space<vmem>>, %arg2: memref<32x128xbf16, #tpu.memory_space<vmem>>, %arg3: memref<1x128xf32, #tpu.memory_space<vmem>>, %arg4: memref<128x128xbf16, #tpu.memory_space<vmem>>, %arg5: memref<1x128xf32, #tpu.memory_space<vmem>>, %arg6: memref<128x16xbf16, #tpu.memory_space<vmem>>, %arg7: memref<16x16xf32, #tpu.memory_space<vmem>>) attributes {dimension_semantics = [#tpu.dimension_semantics<parallel>], iteration_bounds = array<i64: 1>, scalar_prefetch = 0 : i64, scratch_operands = 0 : i64, tpu.core_type = #tpu.core_type<tc>, window_params = [{transform_indices = @transform_0, window_bounds = array<i64: 16, 32>}, {pipeline_mode = #tpu.pipeline_mode<synchronous>, transform_indices = @transform_1, window_bounds = array<i64: 32, 128>}, {pipeline_mode = #tpu.pipeline_mode<synchronous>, transform_indices = @transform_2, window_bounds = array<i64: 1, 128>}, {pipeline_mode = #tpu.pipeline_mode<synchronous>, transform_indices = @transform_3, window_bounds = array<i64: 128, 128>}, {pipeline_mode = #tpu.pipeline_mode<synchronous>, transform_indices = @transform_4, window_bounds = array<i64: 1, 128>}, {pipeline_mode = #tpu.pipeline_mode<synchronous>, transform_indices = @transform_5, window_bounds = array<i64: 128, 16>}, {transform_indices = @transform_6, window_bounds = array<i64: 16, 16>}]} {
    %c0 = arith.constant 0 : index
    %c0_0 = arith.constant 0 : index
    %0 = vector.load %arg1[%c0, %c0_0] : memref<16x32xf32, #tpu.memory_space<vmem>>, vector<16x32xf32>
    %1 = arith.truncf %0 : vector<16x32xf32> to vector<16x32xbf16>
    %c0_1 = arith.constant 0 : index
    %c0_2 = arith.constant 0 : index
    %2 = vector.load %arg2[%c0_1, %c0_2] : memref<32x128xbf16, #tpu.memory_space<vmem>>, vector<32x128xbf16>
    %cst = arith.constant dense<0.000000e+00> : vector<16x128xf32>
    %3 = tpu.matmul %1, %2, %cst {dimension_numbers = #tpu.dot_dimension_numbers<[1], [0], [0], [1], [0, 0, 1, 1], [], []>} : vector<16x32xbf16>, vector<32x128xbf16>, vector<16x128xf32> -> vector<16x128xf32>
    %c0_3 = arith.constant 0 : index
    %c0_4 = arith.constant 0 : index
    %4 = vector.load %arg3[%c0_3, %c0_4] : memref<1x128xf32, #tpu.memory_space<vmem>>, vector<1x128xf32>
    %5 = vector.broadcast %4 : vector<1x128xf32> to vector<16x128xf32>
    %6 = arith.addf %3, %5 : vector<16x128xf32>
    %cst_5 = arith.constant 0.000000e+00 : f32
    %7 = vector.broadcast %cst_5 : f32 to vector<16x128xf32>
    %8 = arith.maximumf %6, %7 : vector<16x128xf32>
    %9 = arith.truncf %8 : vector<16x128xf32> to vector<16x128xbf16>
    %c0_6 = arith.constant 0 : index
    %c0_7 = arith.constant 0 : index
    %10 = vector.load %arg4[%c0_6, %c0_7] : memref<128x128xbf16, #tpu.memory_space<vmem>>, vector<128x128xbf16>
    %cst_8 = arith.constant dense<0.000000e+00> : vector<16x128xf32>
    %11 = tpu.matmul %9, %10, %cst_8 {dimension_numbers = #tpu.dot_dimension_numbers<[1], [0], [0], [1], [0, 0, 1, 1], [], []>} : vector<16x128xbf16>, vector<128x128xbf16>, vector<16x128xf32> -> vector<16x128xf32>
    %c0_9 = arith.constant 0 : index
    %c0_10 = arith.constant 0 : index
    %12 = vector.load %arg5[%c0_9, %c0_10] : memref<1x128xf32, #tpu.memory_space<vmem>>, vector<1x128xf32>
    %13 = vector.broadcast %12 : vector<1x128xf32> to vector<16x128xf32>
    %14 = arith.addf %11, %13 : vector<16x128xf32>
    %cst_11 = arith.constant 0.000000e+00 : f32
    %15 = vector.broadcast %cst_11 : f32 to vector<16x128xf32>
    %16 = arith.maximumf %14, %15 : vector<16x128xf32>
    %17 = arith.truncf %16 : vector<16x128xf32> to vector<16x128xbf16>
    %c0_12 = arith.constant 0 : index
    %c0_13 = arith.constant 0 : index
    %18 = vector.load %arg6[%c0_12, %c0_13] : memref<128x16xbf16, #tpu.memory_space<vmem>>, vector<128x16xbf16>
    %cst_14 = arith.constant dense<0.000000e+00> : vector<16x16xf32>
    %19 = tpu.matmul %17, %18, %cst_14 {dimension_numbers = #tpu.dot_dimension_numbers<[1], [0], [0], [1], [0, 0, 1, 1], [], []>} : vector<16x128xbf16>, vector<128x16xbf16>, vector<16x16xf32> -> vector<16x16xf32>
    %c0_15 = arith.constant 0 : index
    %c0_16 = arith.constant 0 : index
    %20 = vector.load %arg7[%c0_15, %c0_16] : memref<16x16xf32, #tpu.memory_space<vmem>>, vector<16x16xf32>
    tpu.vector_store %arg7[%c0_15, %c0_16], %19 {strides = array<i32>} : memref<16x16xf32, #tpu.memory_space<vmem>>, vector<16x16xf32>,
    return
  }
  func.func @transform_0(%arg0: i32) -> (i32, i32) {
    %c0_i32 = arith.constant 0 : i32
    %c0_i32_0 = arith.constant 0 : i32
    return %arg0, %c0_i32 : i32, i32
  }
  func.func @transform_1(%arg0: i32) -> (i32, i32) {
    %c0_i32 = arith.constant 0 : i32
    %c0_i32_0 = arith.constant 0 : i32
    %c0_i32_1 = arith.constant 0 : i32
    return %c0_i32, %c0_i32_0 : i32, i32
  }
  func.func @transform_2(%arg0: i32) -> (i32, i32) {
    %c0_i32 = arith.constant 0 : i32
    %c0_i32_0 = arith.constant 0 : i32
    %c0_i32_1 = arith.constant 0 : i32
    return %c0_i32, %c0_i32_0 : i32, i32
  }
  func.func @transform_3(%arg0: i32) -> (i32, i32) {
    %c0_i32 = arith.constant 0 : i32
    %c0_i32_0 = arith.constant 0 : i32
    %c0_i32_1 = arith.constant 0 : i32
    return %c0_i32, %c0_i32_0 : i32, i32
  }
  func.func @transform_4(%arg0: i32) -> (i32, i32) {
    %c0_i32 = arith.constant 0 : i32
    %c0_i32_0 = arith.constant 0 : i32
    %c0_i32_1 = arith.constant 0 : i32
    return %c0_i32, %c0_i32_0 : i32, i32
  }
  func.func @transform_5(%arg0: i32) -> (i32, i32) {
    %c0_i32 = arith.constant 0 : i32
    %c0_i32_0 = arith.constant 0 : i32
    %c0_i32_1 = arith.constant 0 : i32
    return %c0_i32, %c0_i32_0 : i32, i32
  }
  func.func @transform_6(%arg0: i32) -> (i32, i32) {
    %c0_i32 = arith.constant 0 : i32
    %c0_i32_0 = arith.constant 0 : i32
    return %arg0, %c0_i32 : i32, i32
  }
}

</mosaic_0001>

<llo_original>
// kernel: spe_spa_atten_decoder.1
$region0: #{spe_spa_atten_decoder.1}
  #allocation0 [shape = 'u32[]', space=smem, size = 0x4, offset = 0x4, fixed_abs, tag = 'smem constant byte address 0x4 - core index']
  #allocation1 [shape = 'u32[144,128]{1,0:T(1,128)}', space=vmem, size = 0x12000, scoped, tag = 'internal scratch']
  %s0 = inlined_call_operand.hbm [shape: f32[16,32], index: 0, kind: input, shape index: {}]
  %s1 = inlined_call_operand.hbm [shape: bf16[32,128], index: 1, kind: input, shape index: {}]
  %s2 = inlined_call_operand.vmem [shape: f32[1,128], index: 2, kind: input, shape index: {}]
  %s3 = inlined_call_operand.vmem [shape: bf16[128,128], index: 3, kind: input, shape index: {}]
  %s4 = inlined_call_operand.vmem [shape: f32[1,128], index: 4, kind: input, shape index: {}]
  %s5 = inlined_call_operand.vmem [shape: bf16[128,16], index: 5, kind: input, shape index: {}]
  %s6 = inlined_call_operand.hbm [shape: f32[16,16], index: 6, kind: output, shape index: {}]
  %s7 = sld [smem:[#allocation0]]
  $region42: #{spe_spa_atten_decoder.1} parent=0
    _
  %s9 = ssub.s32 1, %s7
  %s10 = scalar_select 0, %s9, %s7
  $region1: #{spe_spa_atten_decoder.1} parent=0
    #allocation2 [shape = 'u8[8192]{0}', space=vmem, size = 0x2000, scoped, tag = 'input window, operand 0, single buffered']
    #allocation3 [shape = 's32[1]{0}', space=sflag, size = 0x4, scoped, tag = 'scoped memory for spe_spa_atten_decoder.1']
    #allocation4 [shape = 's32[1]{0}', space=sflag, size = 0x4, scoped, tag = 'scoped memory for spe_spa_atten_decoder.1']
    #allocation5 [shape = 'u8[8192]{0}', space=vmem, size = 0x2000, scoped, tag = 'input window, operand 1, single buffered']
    #allocation6 [shape = 's32[1]{0}', space=sflag, size = 0x4, scoped, tag = 'scoped memory for spe_spa_atten_decoder.1']
    #allocation7 [shape = 'u8[8192]{0}', space=vmem, size = 0x2000, scoped, tag = 'output window, operand 0, single buffered']
    %11 = vsyncpa [#allocation3], 0
    %12 = vsyncpa [#allocation6], 0
    %13 = vsyncpa [#allocation4], 0
    // Predicated region
    $region2: #{spe_spa_atten_decoder.1} parent=1 // pred_check
      _
    $region3: #{spe_spa_atten_decoder.1} parent=1 // pred_check_branch
      %15 = sbr.rel (0) target = $region5
    $region4: #{spe_spa_atten_decoder.1} parent=1 // pred_region
      %s17 = ssub.s32 256, 256
      %18 = vsyncadd [#allocation3], %s17
      %s19 = sshll.u32 [#allocation2], 4
      %s20 = int_to_ptr.vmem [resolvable:$true] %s19
      %25 = dma.hbm_to_vmem [thread:$0]  %s0, 256, %s20, [#allocation3], 128, 128, 8
    $region5: #{spe_spa_atten_decoder.1} parent=1 // pred_fallthru
      _
    // Predicated region
    $region6: #{spe_spa_atten_decoder.1} parent=1 // pred_check
      _
    $region7: #{spe_spa_atten_decoder.1} parent=1 // pred_check_branch
      %27 = sbr.rel (0) target = $region9
    $region8: #{spe_spa_atten_decoder.1} parent=1 // pred_region
      %s29 = ssub.s32 256, 256
      %30 = vsyncadd [#allocation6], %s29
      %s31 = sshll.u32 [#allocation5], 4
      %s32 = int_to_ptr.vmem [resolvable:$true] %s31
      %37 = dma.hbm_to_vmem [thread:$0]  %s1, 256, %s32, [#allocation6], 64, 64, 4
    $region9: #{spe_spa_atten_decoder.1} parent=1 // pred_fallthru
      _
    // Predicated region
    $region10: #{spe_spa_atten_decoder.1} parent=1 // pred_check
      _
    $region11: #{spe_spa_atten_decoder.1} parent=1 // pred_check_branch
      %39 = sbr.rel (0) target = $region13
    $region12: #{spe_spa_atten_decoder.1} parent=1 // pred_region
      _
    $region13: #{spe_spa_atten_decoder.1} parent=1 // pred_fallthru
      _
    // Predicated region
    $region14: #{spe_spa_atten_decoder.1} parent=1 // pred_check
      _
    $region15: #{spe_spa_atten_decoder.1} parent=1 // pred_check_branch
      %41 = sbr.rel (0) target = $region17
    $region16: #{spe_spa_atten_decoder.1} parent=1 // pred_region
      _
    $region17: #{spe_spa_atten_decoder.1} parent=1 // pred_fallthru
      _
    // Predicated region
    $region18: #{spe_spa_atten_decoder.1} parent=1 // pred_check
      _
    $region19: #{spe_spa_atten_decoder.1} parent=1 // pred_check_branch
      %43 = sbr.rel (0) target = $region21
    $region20: #{spe_spa_atten_decoder.1} parent=1 // pred_region
      _
    $region21: #{spe_spa_atten_decoder.1} parent=1 // pred_fallthru
      _
    // Predicated region
    $region22: #{spe_spa_atten_decoder.1} parent=1 // pred_check
      _
    $region23: #{spe_spa_atten_decoder.1} parent=1 // pred_check_branch
      %45 = sbr.rel (0) target = $region25
    $region24: #{spe_spa_atten_decoder.1} parent=1 // pred_region
      _
    $region25: #{spe_spa_atten_decoder.1} parent=1 // pred_fallthru
      _
    // Predicated region
    $region26: #{spe_spa_atten_decoder.1} parent=1 // pred_check
      _
    $region27: #{spe_spa_atten_decoder.1} parent=1 // pred_check_branch
      %47 = sbr.rel (0) target = $region29
    $region28: #{spe_spa_atten_decoder.1} parent=1 // pred_region
      %48 = dma.done [#allocation3], 256
    $region29: #{spe_spa_atten_decoder.1} parent=1 // pred_fallthru
      _
    // Predicated region
    $region30: #{spe_spa_atten_decoder.1} parent=1 // pred_check
      _
    $region31: #{spe_spa_atten_decoder.1} parent=1 // pred_check_branch
      %50 = sbr.rel (0) target = $region33
    $region32: #{spe_spa_atten_decoder.1} parent=1 // pred_region
      %51 = dma.done [#allocation6], 256
    $region33: #{spe_spa_atten_decoder.1} parent=1 // pred_fallthru
      _
    %v53 = vld [vmem:[#allocation2] sm:$0xff]
    %v54 = vld [vmem:[#allocation2 + $0x8] sm:$0xff]
    %v55 = vpack.c.bf16 %v54, %v53
    %v56 = vld [vmem:[#allocation5] sm:$0xf]
    %v57 = vld [vmem:[#allocation5 + $0x4] sm:$0xf]
    %v58 = vld [vmem:[#allocation5 + $0x8] sm:$0xf]
    %v59 = vld [vmem:[#allocation5 + $0xc] sm:$0xf]
    %v60 = vld [vmem:[%s2] sm:$0x1]
    %v62 = vlaneseq
    %v63 = vshrl.u32 %v62, 7
    %v64 = vsub.s32 0, %v63
    %v65 = vrot.slane %v60, %v64
    %v71 = vunpack.c.l.b16 %v56
    %v72 = vunpack.c.l.b16 %v57
    %v73 = vunpack.c.l.b16 %v58
    %v74 = vunpack.c.l.b16 %v59
    %v75 = vpack.c.b16 %v72, %v71
    %v76 = vpack.c.b16 %v74, %v73
    %vm79 = vcmask 261120
    %v81 = vsel %vm79, %v55, 0
    %83 = vmatprep.subr.bf16.mxu0 0
    %84 = vmatpush1.bf16.msra.mxu0 0
    %85 = vmatprep.subr.bf16.mxu0 0
    %86 = vmatpush1.bf16.msra.mxu0 0
    %87 = vmatprep.subr.bf16.mxu0 0
    %88 = vmatpush1.bf16.msra.mxu0 0
    %89 = vmatprep.subr.bf16.mxu0 0
    %90 = vmatpush1.bf16.msra.mxu0 0
    %91 = vmatprep.subr.bf16.mxu0 0
    %92 = vmatpush1.bf16.msra.mxu0 0
    %93 = vmatprep.subr.bf16.mxu0 0
    %94 = vmatpush1.bf16.msra.mxu0 0
    %95 = vmatprep.subr.bf16.mxu0 0
    %96 = vmatpush1.bf16.msra.mxu0 %v76
    %97 = vmatprep.subr.bf16.mxu0 0
    %98 = vmatpush1.bf16.msra.mxu0 %v75
    %99 = vmatprep.subr.bf16.mxu0 0
    %100 = vmatpush2.bf16.msra.mxu0 0
    %101 = vmatprep.subr.bf16.mxu0 0
    %102 = vmatpush2.bf16.msra.mxu0 0
    %103 = vmatprep.subr.bf16.mxu0 0
    %104 = vmatpush2.bf16.msra.mxu0 0
    %105 = vmatprep.subr.bf16.mxu0 0
    %106 = vmatpush2.bf16.msra.mxu0 0
    %107 = vmatprep.subr.bf16.mxu0 0
    %108 = vmatpush2.bf16.msra.mxu0 0
    %109 = vmatprep.subr.bf16.mxu0 0
    %110 = vmatpush2.bf16.msra.mxu0 0
    %111 = vmatprep.subr.bf16.mxu0 0
    %112 = vmatpush2.bf16.msra.mxu0 0
    %113 = vmatprep.subr.bf16.mxu0 0
    %114 = vmatpush2.bf16.msra.mxu0 0
    %115 = vmatprep.mubr.bf16.mxu0 0
    %116 = vmatmul.mubr.bf16.gmra.mxu0 %v81
    %v117 = vpop.f32.mrf.mxu0
    %v118 = vadd.f32 %v65, %v117
    %v119 = vpop.f32.mrf.mxu0
    %v120 = vpop.f32.mrf.mxu0
    %v121 = vadd.f32 %v65, %v120
    %v122 = vpop.f32.mrf.mxu0
    %123 = vdwg.mxu0
    %v124 = vmax.f32 %v118, 0.0
    %v125 = vmax.f32 %v121, 0.0
    %v126 = vpack.c.bf16 %v125, %v124
    %v127 = vld [vmem:[%s3] sm:$0xf]
    %v128 = vld [vmem:[%s3 + $0x4] sm:$0xf]
    %v129 = vld [vmem:[%s3 + $0x8] sm:$0xf]
    %v130 = vld [vmem:[%s3 + $0xc] sm:$0xf]
    %v131 = vld [vmem:[%s3 + $0x10] sm:$0xf]
    %v132 = vld [vmem:[%s3 + $0x14] sm:$0xf]
    %v133 = vld [vmem:[%s3 + $0x18] sm:$0xf]
    %v134 = vld [vmem:[%s3 + $0x1c] sm:$0xf]
    %v135 = vld [vmem:[%s3 + $0x20] sm:$0xf]
    %v136 = vld [vmem:[%s3 + $0x24] sm:$0xf]
    %v137 = vld [vmem:[%s3 + $0x28] sm:$0xf]
    %v138 = vld [vmem:[%s3 + $0x2c] sm:$0xf]
    %v139 = vld [vmem:[%s3 + $0x30] sm:$0xf]
    %v140 = vld [vmem:[%s3 + $0x34] sm:$0xf]
    %v141 = vld [vmem:[%s3 + $0x38] sm:$0xf]
    %v142 = vld [vmem:[%s3 + $0x3c] sm:$0xf]
    %v143 = vld [vmem:[%s4] sm:$0x1]
    %v145 = vlaneseq
    %v146 = vshrl.u32 %v145, 7
    %v147 = vsub.s32 0, %v146
    %v148 = vrot.slane %v143, %v147
    %v166 = vunpack.c.l.b16 %v127
    %v167 = vunpack.c.l.b16 %v128
    %v168 = vunpack.c.l.b16 %v129
    %v169 = vunpack.c.l.b16 %v130
    %v170 = vunpack.c.l.b16 %v131
    %v171 = vunpack.c.l.b16 %v132
    %v172 = vunpack.c.l.b16 %v133
    %v173 = vunpack.c.l.b16 %v134
    %v174 = vunpack.c.l.b16 %v135
    %v175 = vunpack.c.l.b16 %v136
    %v176 = vunpack.c.l.b16 %v137
    %v177 = vunpack.c.l.b16 %v138
    %v178 = vunpack.c.l.b16 %v139
    %v179 = vunpack.c.l.b16 %v140
    %v180 = vunpack.c.l.b16 %v141
    %v181 = vunpack.c.l.b16 %v142
    %v182 = vpack.c.b16 %v167, %v166
    %v183 = vpack.c.b16 %v169, %v168
    %v184 = vpack.c.b16 %v171, %v170
    %v185 = vpack.c.b16 %v173, %v172
    %v186 = vpack.c.b16 %v175, %v174
    %v187 = vpack.c.b16 %v177, %v176
    %v188 = vpack.c.b16 %v179, %v178
    %v189 = vpack.c.b16 %v181, %v180
    %198 = vmatprep.subr.bf16.mxu0 0
    %199 = vmatpush1.bf16.msra.mxu0 %v189
    %200 = vmatprep.subr.bf16.mxu0 0
    %201 = vmatpush1.bf16.msra.mxu0 %v188
    %202 = vmatprep.subr.bf16.mxu0 0
    %203 = vmatpush1.bf16.msra.mxu0 %v187
    %204 = vmatprep.subr.bf16.mxu0 0
    %205 = vmatpush1.bf16.msra.mxu0 %v186
    %206 = vmatprep.subr.bf16.mxu0 0
    %207 = vmatpush1.bf16.msra.mxu0 %v185
    %208 = vmatprep.subr.bf16.mxu0 0
    %209 = vmatpush1.bf16.msra.mxu0 %v184
    %210 = vmatprep.subr.bf16.mxu0 0
    %211 = vmatpush1.bf16.msra.mxu0 %v183
    %212 = vmatprep.subr.bf16.mxu0 0
    %213 = vmatpush1.bf16.msra.mxu0 %v182
    %214 = vmatprep.subr.bf16.mxu0 0
    %215 = vmatpush2.bf16.msra.mxu0 0
    %216 = vmatprep.subr.bf16.mxu0 0
    %217 = vmatpush2.bf16.msra.mxu0 0
    %218 = vmatprep.subr.bf16.mxu0 0
    %219 = vmatpush2.bf16.msra.mxu0 0
    %220 = vmatprep.subr.bf16.mxu0 0
    %221 = vmatpush2.bf16.msra.mxu0 0
    %222 = vmatprep.subr.bf16.mxu0 0
    %223 = vmatpush2.bf16.msra.mxu0 0
    %224 = vmatprep.subr.bf16.mxu0 0
    %225 = vmatpush2.bf16.msra.mxu0 0
    %226 = vmatprep.subr.bf16.mxu0 0
    %227 = vmatpush2.bf16.msra.mxu0 0
    %228 = vmatprep.subr.bf16.mxu0 0
    %229 = vmatpush2.bf16.msra.mxu0 0
    %230 = vmatprep.mubr.bf16.mxu0 0
    %231 = vmatmul.mubr.bf16.gmra.mxu0 %v126
    %v232 = vpop.f32.mrf.mxu0
    %v233 = vadd.f32 %v148, %v232
    %v234 = vpop.f32.mrf.mxu0
    %v235 = vpop.f32.mrf.mxu0
    %v236 = vadd.f32 %v148, %v235
    %v237 = vpop.f32.mrf.mxu0
    %238 = vdwg.mxu0
    %v239 = vmax.f32 %v233, 0.0
    %v240 = vmax.f32 %v236, 0.0
    %v241 = vpack.c.bf16 %v240, %v239
    %v242 = vld [vmem:[%s5] sm:$0xf]
    %v243 = vld [vmem:[%s5 + $0x4] sm:$0xf]
    %v244 = vld [vmem:[%s5 + $0x8] sm:$0xf]
    %v245 = vld [vmem:[%s5 + $0xc] sm:$0xf]
    %v246 = vld [vmem:[%s5 + $0x10] sm:$0xf]
    %v247 = vld [vmem:[%s5 + $0x14] sm:$0xf]
    %v248 = vld [vmem:[%s5 + $0x18] sm:$0xf]
    %v249 = vld [vmem:[%s5 + $0x1c] sm:$0xf]
    %v250 = vld [vmem:[%s5 + $0x20] sm:$0xf]
    %v251 = vld [vmem:[%s5 + $0x24] sm:$0xf]
    %v252 = vld [vmem:[%s5 + $0x28] sm:$0xf]
    %v253 = vld [vmem:[%s5 + $0x2c] sm:$0xf]
    %v254 = vld [vmem:[%s5 + $0x30] sm:$0xf]
    %v255 = vld [vmem:[%s5 + $0x34] sm:$0xf]
    %v256 = vld [vmem:[%s5 + $0x38] sm:$0xf]
    %v257 = vld [vmem:[%s5 + $0x3c] sm:$0xf]
    %v274 = vunpack.c.l.b16 %v242
    %v275 = vunpack.c.l.b16 %v243
    %v276 = vunpack.c.l.b16 %v244
    %v277 = vunpack.c.l.b16 %v245
    %v278 = vunpack.c.l.b16 %v246
    %v279 = vunpack.c.l.b16 %v247
    %v280 = vunpack.c.l.b16 %v248
    %v281 = vunpack.c.l.b16 %v249
    %v282 = vunpack.c.l.b16 %v250
    %v283 = vunpack.c.l.b16 %v251
    %v284 = vunpack.c.l.b16 %v252
    %v285 = vunpack.c.l.b16 %v253
    %v286 = vunpack.c.l.b16 %v254
    %v287 = vunpack.c.l.b16 %v255
    %v288 = vunpack.c.l.b16 %v256
    %v289 = vunpack.c.l.b16 %v257
    %v290 = vpack.c.b16 %v275, %v274
    %v291 = vpack.c.b16 %v277, %v276
    %v292 = vpack.c.b16 %v279, %v278
    %v293 = vpack.c.b16 %v281, %v280
    %v294 = vpack.c.b16 %v283, %v282
    %v295 = vpack.c.b16 %v285, %v284
    %v296 = vpack.c.b16 %v287, %v286
    %v297 = vpack.c.b16 %v289, %v288
    %306 = vmatprep.subr.bf16.mxu0 0
    %307 = vmatpush1.bf16.msra.mxu0 %v297
    %308 = vmatprep.subr.bf16.mxu0 0
    %309 = vmatpush1.bf16.msra.mxu0 %v296
    %310 = vmatprep.subr.bf16.mxu0 0
    %311 = vmatpush1.bf16.msra.mxu0 %v295
    %312 = vmatprep.subr.bf16.mxu0 0
    %313 = vmatpush1.bf16.msra.mxu0 %v294
    %314 = vmatprep.subr.bf16.mxu0 0
    %315 = vmatpush1.bf16.msra.mxu0 %v293
    %316 = vmatprep.subr.bf16.mxu0 0
    %317 = vmatpush1.bf16.msra.mxu0 %v292
    %318 = vmatprep.subr.bf16.mxu0 0
    %319 = vmatpush1.bf16.msra.mxu0 %v291
    %320 = vmatprep.subr.bf16.mxu0 0
    %321 = vmatpush1.bf16.msra.mxu0 %v290
    %322 = vmatprep.subr.bf16.mxu0 0
    %323 = vmatpush2.bf16.msra.mxu0 0
    %324 = vmatprep.subr.bf16.mxu0 0
    %325 = vmatpush2.bf16.msra.mxu0 0
    %326 = vmatprep.subr.bf16.mxu0 0
    %327 = vmatpush2.bf16.msra.mxu0 0
    %328 = vmatprep.subr.bf16.mxu0 0
    %329 = vmatpush2.bf16.msra.mxu0 0
    %330 = vmatprep.subr.bf16.mxu0 0
    %331 = vmatpush2.bf16.msra.mxu0 0
    %332 = vmatprep.subr.bf16.mxu0 0
    %333 = vmatpush2.bf16.msra.mxu0 0
    %334 = vmatprep.subr.bf16.mxu0 0
    %335 = vmatpush2.bf16.msra.mxu0 0
    %336 = vmatprep.subr.bf16.mxu0 0
    %337 = vmatpush2.bf16.msra.mxu0 0
    %338 = vmatprep.mubr.bf16.mxu0 0
    %339 = vmatmul.mubr.bf16.gmra.mxu0 %v241
    %v340 = vpop.f32.mrf.mxu0
    %v341 = vadd.f32 0.0, %v340
    %v342 = vpop.f32.mrf.mxu0
    %v343 = vpop.f32.mrf.mxu0
    %v344 = vadd.f32 0.0, %v343
    %v345 = vpop.f32.mrf.mxu0
    %346 = vdwg.mxu0
    %vm347 = vcmask 130048
    %348 = vst.msk [vmem:[#allocation7] sm:$0xff] %vm347, %v341
    %349 = vst.msk [vmem:[#allocation7 + $0x8] sm:$0xff] %vm347, %v344
    // Predicated region
    $region34: #{spe_spa_atten_decoder.1} parent=1 // pred_check
      _
    $region35: #{spe_spa_atten_decoder.1} parent=1 // pred_check_branch
      %351 = sbr.rel (0) target = $region37
    $region36: #{spe_spa_atten_decoder.1} parent=1 // pred_region
      %s353 = ssub.s32 256, 256
      %354 = vsyncadd [#allocation4], %s353
      %s355 = sshll.u32 [#allocation7], 4
      %s356 = int_to_ptr.vmem [resolvable:$true] %s355
      %361 = dma.vmem_to_hbm [thread:$0]  %s356, 256, %s6, [#allocation4], 128, 128, 8
    $region37: #{spe_spa_atten_decoder.1} parent=1 // pred_fallthru
      _
    // Predicated region
    $region38: #{spe_spa_atten_decoder.1} parent=1 // pred_check
      _
    $region39: #{spe_spa_atten_decoder.1} parent=1 // pred_check_branch
      %363 = sbr.rel (0) target = $region41
    $region40: #{spe_spa_atten_decoder.1} parent=1 // pred_region
      %364 = dma.done [#allocation4], 256
    $region41: #{spe_spa_atten_decoder.1} parent=1 // pred_fallthru
      _
    %365 = vsyncpa [#allocation3], 1
    %366 = vsyncpa [#allocation6], 1
    %367 = vsyncpa [#allocation4], 1

</llo_original>
